<compile_context>
chip_gen: v6e
topology: v6e:2x2x1
jax: 0.10.0
libtpu: 0.0.40
codegen_flags: <defaults>
</compile_context>

<pallas_src>
import functools
import math

import jax
import jax.numpy as jnp
from jax import lax
from jax.experimental import pallas as pl
from jax.experimental.pallas import tpu as pltpu

LANE = 128


def _round_up(x, m):
    return ((x + m - 1) // m) * m


def _dense_gat_kernel(x_ref, adj_ref, w1_ref, ad1_ref, b1_ref,
                      w2_ref, ad2_ref, b2_ref, o_ref,
                      *, n, h_att, c_att, negative_slope):
    """Fused 2-layer DenseGAT forward.

    x_ref   : [N, Fp]   features, padded; column F (just past the real features) is 1.0
    adj_ref : [N, N]    raw adjacency (self-loops added in-kernel)
    w*_ref  : [Cin_p, Cout_p] augmented weight: [:, :C]=W, [:, C]=W @ att_src^T,
              ones-indicator row -> column C+1 (yields an exact all-ones column of h)
    ad*_ref : [1, Cout_p] att_dst, zero padded
    b*_ref  : [1, Cout_p] bias, zero padded
    o_ref   : [N, Cp]   lane-dense output (real classes in [:, :num_classes])
    """
    # Self loops fused into the kernel (adj[idx, idx] = 1).
    row = lax.broadcasted_iota(jnp.int32, (n, n), 0)
    col = lax.broadcasted_iota(jnp.int32, (n, n), 1)
    adj = jnp.where(row == col, 1.0, adj_ref[...].astype(jnp.float32))

    def gat_layer(feat, w_ref_, ad_ref_, b_ref_, att_col, apply_relu):
        one_col = att_col + 1
        # Fused projection on the MXU (bf16 operands, f32 accumulate):
        #   columns [:att_col] = x @ W, column att_col = alpha_src, column one_col = 1.
        h_aug = jnp.dot(feat.astype(jnp.bfloat16), w_ref_[...].astype(jnp.bfloat16),
                        preferred_element_type=jnp.float32)             # [N, Cout_p]
        a_src = h_aug[:, att_col:att_col + 1]                           # [N, 1]
        a_dst = lax.dot_general(ad_ref_[...].astype(jnp.bfloat16),
                                h_aug.astype(jnp.bfloat16),
                                (((1,), (1,)), ((), ())),
                                preferred_element_type=jnp.float32)     # [1, N]

        alpha = a_src + a_dst                                           # [N, N]
        alpha = jnp.where(alpha >= 0, alpha, negative_slope * alpha)    # leaky ReLU (f32 VPU)
        e = adj * jnp.exp(alpha)                                        # [N, N] masked exp

        # Aggregation + softmax denominator in ONE MXU matmul:
        #   raw[j, c]       = sum_i e[i, j] * h_aug[i, c]
        #   raw[j, one_col] = sum_i e[i, j]            (column sum, dst-row oriented)
        # Softmax over the source axis is then just a per-row scale of `raw`;
        # no normalized [N, N] matrix and no second adjacency multiply.
        raw = lax.dot_general(e.astype(jnp.bfloat16), h_aug.astype(jnp.bfloat16),
                              (((0,), (0,)), ((), ())),
                              preferred_element_type=jnp.float32)       # [N, Cout_p]
        inv = pl.reciprocal(raw[:, one_col:one_col + 1], approx=True)   # [N, 1] (EUP)
        out = raw * inv + b_ref_[...].astype(jnp.float32)
        if apply_relu:
            out = jnp.maximum(out, 0.0)
        # Pin the ones column exactly: the next layer reuses it (through its own
        # ones-indicator weight row) to generate its softmax denominator.
        lanes = lax.broadcasted_iota(jnp.int32, out.shape, 1)
        out = jnp.where(lanes == one_col, 1.0, out)
        return out

    h1 = gat_layer(x_ref[...].astype(jnp.float32), w1_ref, ad1_ref, b1_ref,
                   h_att, apply_relu=True)
    # F.dropout(training=False) between the layers -> identity.
    out = gat_layer(h1, w2_ref, ad2_ref, b2_ref, c_att, apply_relu=False)
    o_ref[...] = out.astype(o_ref.dtype)


def dense_gat_forward(params, x, adj):
    """DenseGAT.forward: conv1 -> relu -> (dropout: eval) -> conv2, one fused kernel."""
    n, f = x.shape
    h = params["w1"].shape[1]
    c = params["w2"].shape[1]
    fp = _round_up(f + 1, LANE)      # +1: ones column
    hp = _round_up(h + 2, LANE)      # +2: folded att_src column + ones column
    cp = _round_up(c + 2, LANE)

    # Features padded to 128 lanes; trailing real column (index f) is all ones.
    x_p = (jnp.zeros((n, fp), jnp.float32)
           .at[:, :f].set(x)
           .at[:, f].set(1.0))

    # Augmented weights: [W | W att_src^T | ones-indicator | 0...]
    w1_aug = (jnp.zeros((fp, hp), jnp.float32)
              .at[:f, :h].set(params["w1"])
              .at[:f, h].set((params["w1"] @ params["att_src1"].T)[:, 0])
              .at[f, h + 1].set(1.0))
    ad1 = jnp.zeros((1, hp), jnp.float32).at[:, :h].set(params["att_dst1"])
    b1 = jnp.zeros((1, hp), jnp.float32).at[:, :h].set(params["bias1"])

    w2_aug = (jnp.zeros((hp, cp), jnp.float32)
              .at[:h, :c].set(params["w2"])
              .at[:h, c].set((params["w2"] @ params["att_src2"].T)[:, 0])
              .at[h + 1, c + 1].set(1.0))          # row h+1 = layer-1 ones column
    ad2 = jnp.zeros((1, cp), jnp.float32).at[:, :c].set(params["att_dst2"])
    b2 = jnp.zeros((1, cp), jnp.float32).at[:, :c].set(params["bias2"])

    kernel = functools.partial(_dense_gat_kernel, n=n, h_att=h, c_att=c,
                               negative_slope=0.2)
    vmem = pl.BlockSpec(memory_space=pltpu.MemorySpace.VMEM)
    out_p = pl.pallas_call(
        kernel,
        out_shape=jax.ShapeDtypeStruct((n, cp), jnp.float32),
        in_specs=[vmem] * 8,
        out_specs=vmem,
        compiler_params=pltpu.CompilerParams(
            vmem_limit_bytes=32 * 1024 * 1024),   # safe on v5e/v6e/v7x; usage is tiny
    )(x_p, adj, w1_aug, ad1, b1, w2_aug, ad2, b2)
    return out_p[:, :c]


def _glorot(key, shape):
    fan_in, fan_out = shape[-2], shape[-1]
    stdv = math.sqrt(6.0 / (fan_in + fan_out))
    return jax.random.uniform(key, shape, jnp.float32, minval=-stdv, maxval=stdv)


def init_dense_gat_params(key, num_features, hidden_channels, num_classes):
    k = jax.random.split(key, 6)
    return {
        "w1": _glorot(k[0], (num_features, hidden_channels)),
        "att_src1": _glorot(k[1], (1, hidden_channels)),
        "att_dst1": _glorot(k[2], (1, hidden_channels)),
        "bias1": jnp.zeros((1, hidden_channels), jnp.float32),
        "w2": _glorot(k[3], (hidden_channels, num_classes)),
        "att_src2": _glorot(k[4], (1, num_classes)),
        "att_dst2": _glorot(k[5], (1, num_classes)),
        "bias2": jnp.zeros((1, num_classes), jnp.float32),
    }


def _reference_forward(params, x, adj):
    """Structure-faithful jnp reference of the PyTorch DenseGAT forward (eval mode),
    with matmul operands in bf16 / f32 accumulation to match the kernel's MXU
    precision choice.  The kernel additionally uses the EUP approximate reciprocal
    for the softmax denominator, hence the modest comparison tolerance in main."""
    n = adj.shape[0]
    idx = jnp.arange(n)
    adj = adj.at[idx, idx].set(1.0)
    bf = jnp.bfloat16

    def mm(a, b):
        return jnp.dot(a.astype(bf), b.astype(bf), preferred_element_type=jnp.float32)

    def conv(feat, w, a_s, a_d, b, relu):
        h = mm(feat, w)
        a_src = mm(feat, w @ a_s.T)[:, 0]          # folded projection, like the kernel
        a_dst = mm(a_d, h.T)[0]
        alpha = a_src[:, None] + a_dst[None, :]
        alpha = jnp.where(alpha >= 0, alpha, 0.2 * alpha)
        e = adj * jnp.exp(alpha)
        e_bf = e.astype(bf).astype(jnp.float32)
        num = jnp.dot(e_bf.T.astype(bf), h.astype(bf),
                      preferred_element_type=jnp.float32)
        den = e_bf.sum(axis=0)
        out = num / den[:, None] + b
        return jnp.maximum(out, 0.0) if relu else out

    h1 = conv(x, params["w1"], params["att_src1"], params["att_dst1"],
              params["bias1"], True)
    return conv(h1, params["w2"], params["att_src2"], params["att_dst2"],
                params["bias2"], False)


if __name__ == "__main__":
    key = jax.random.PRNGKey(0)
    k_x, k_adj, k_params = jax.random.split(key, 3)

    N = 16              # number of nodes
    NUM_FEATURES = 16
    HIDDEN = 32
    NUM_CLASSES = 8

    x = jax.random.normal(k_x, (N, NUM_FEATURES), jnp.float32)
    adj = (jax.random.uniform(k_adj, (N, N)) > 0.7).astype(jnp.float32)

    params = init_dense_gat_params(k_params, NUM_FEATURES, HIDDEN, NUM_CLASSES)

    out = jax.jit(dense_gat_forward)(params, x, adj)
    out = jax.block_until_ready(out)

    ref = _reference_forward(params, x, adj)
    assert out.shape == (N, NUM_CLASSES), out.shape
    max_err = float(jnp.max(jnp.abs(out - ref)))
    assert jnp.allclose(out, ref, rtol=3e-2, atol=3e-2), f"max abs err {max_err}"

    print("KERNEL_OK")
</pallas_src>

<mosaic_0001>
module attributes {stable_mosaic.version = 11 : i64} {
  func.func @_dense_gat_kernel(%arg0: memref<16x128xf32, #tpu.memory_space<vmem>>, %arg1: memref<16x16xf32, #tpu.memory_space<vmem>>, %arg2: memref<128x128xf32, #tpu.memory_space<vmem>>, %arg3: memref<1x128xf32, #tpu.memory_space<vmem>>, %arg4: memref<1x128xf32, #tpu.memory_space<vmem>>, %arg5: memref<128x128xf32, #tpu.memory_space<vmem>>, %arg6: memref<1x128xf32, #tpu.memory_space<vmem>>, %arg7: memref<1x128xf32, #tpu.memory_space<vmem>>, %arg8: memref<16x128xf32, #tpu.memory_space<vmem>>) attributes {dimension_semantics = [], scalar_prefetch = 0 : i64, scratch_operands = 0 : i64, tpu.core_type = #tpu.core_type<tc>} {
    %0 = tpu.iota {dimensions = array<i32: 0>} : vector<16x16xi32>
    %1 = tpu.iota {dimensions = array<i32: 1>} : vector<16x16xi32>
    %2 = arith.cmpi eq, %0, %1 : vector<16x16xi32>
    %c0 = arith.constant 0 : index
    %c0_0 = arith.constant 0 : index
    %3 = vector.load %arg1[%c0, %c0_0] : memref<16x16xf32, #tpu.memory_space<vmem>>, vector<16x16xf32>
    %cst = arith.constant 1.000000e+00 : f32
    %4 = vector.broadcast %cst : f32 to vector<16x16xf32>
    %5 = arith.select %2, %4, %3 : vector<16x16xi1>, vector<16x16xf32>
    %c0_1 = arith.constant 0 : index
    %c0_2 = arith.constant 0 : index
    %6 = vector.load %arg0[%c0_1, %c0_2] : memref<16x128xf32, #tpu.memory_space<vmem>>, vector<16x128xf32>
    %7 = arith.truncf %6 : vector<16x128xf32> to vector<16x128xbf16>
    %c0_3 = arith.constant 0 : index
    %c0_4 = arith.constant 0 : index
    %8 = vector.load %arg2[%c0_3, %c0_4] : memref<128x128xf32, #tpu.memory_space<vmem>>, vector<128x128xf32>
    %9 = arith.truncf %8 : vector<128x128xf32> to vector<128x128xbf16>
    %cst_5 = arith.constant dense<0.000000e+00> : vector<16x128xf32>
    %10 = tpu.matmul %7, %9, %cst_5 {dimension_numbers = #tpu.dot_dimension_numbers<[1], [0], [0], [1], [0, 0, 1, 1], [], []>} : vector<16x128xbf16>, vector<128x128xbf16>, vector<16x128xf32> -> vector<16x128xf32>
    %11 = vector.extract_strided_slice %10 {offsets = [0, 32], sizes = [16, 1], strides = [1, 1]} : vector<16x128xf32> to vector<16x1xf32>
    %c0_6 = arith.constant 0 : index
    %c0_7 = arith.constant 0 : index
    %12 = vector.load %arg3[%c0_6, %c0_7] : memref<1x128xf32, #tpu.memory_space<vmem>>, vector<1x128xf32>
    %13 = arith.truncf %12 : vector<1x128xf32> to vector<1x128xbf16>
    %14 = arith.truncf %10 : vector<16x128xf32> to vector<16x128xbf16>
    %cst_8 = arith.constant dense<0.000000e+00> : vector<1x16xf32>
    %15 = tpu.matmul %13, %14, %cst_8 {dimension_numbers = #tpu.dot_dimension_numbers<[1], [1], [0], [0], [0, 0, 1, 0], [], []>} : vector<1x128xbf16>, vector<16x128xbf16>, vector<1x16xf32> -> vector<1x16xf32>
    %16 = vector.broadcast %11 : vector<16x1xf32> to vector<16x16xf32>
    %17 = vector.broadcast %15 : vector<1x16xf32> to vector<16x16xf32>
    %18 = arith.addf %16, %17 : vector<16x16xf32>
    %cst_9 = arith.constant 0.000000e+00 : f32
    %19 = vector.broadcast %cst_9 : f32 to vector<16x16xf32>
    %20 = arith.cmpf oge, %18, %19 : vector<16x16xf32>
    %cst_10 = arith.constant 2.000000e-01 : f32
    %21 = vector.broadcast %cst_10 : f32 to vector<16x16xf32>
    %22 = arith.mulf %21, %18 : vector<16x16xf32>
    %23 = arith.select %20, %18, %22 : vector<16x16xi1>, vector<16x16xf32>
    %24 = math.exp %23 : vector<16x16xf32>
    %25 = arith.mulf %5, %24 : vector<16x16xf32>
    %26 = arith.truncf %25 : vector<16x16xf32> to vector<16x16xbf16>
    %27 = arith.truncf %10 : vector<16x128xf32> to vector<16x128xbf16>
    %cst_11 = arith.constant dense<0.000000e+00> : vector<16x128xf32>
    %28 = tpu.matmul %26, %27, %cst_11 {dimension_numbers = #tpu.dot_dimension_numbers<[0], [0], [1], [1], [0, 1, 1, 1], [], []>} : vector<16x16xbf16>, vector<16x128xbf16>, vector<16x128xf32> -> vector<16x128xf32>
    %29 = vector.extract_strided_slice %28 {offsets = [0, 33], sizes = [16, 1], strides = [1, 1]} : vector<16x128xf32> to vector<16x1xf32>
    %30 = tpu.reciprocal %29 {approx = true} : vector<16x1xf32> -> vector<16x1xf32>
    %31 = vector.broadcast %30 : vector<16x1xf32> to vector<16x128xf32>
    %32 = arith.mulf %28, %31 : vector<16x128xf32>
    %c0_12 = arith.constant 0 : index
    %c0_13 = arith.constant 0 : index
    %33 = vector.load %arg4[%c0_12, %c0_13] : memref<1x128xf32, #tpu.memory_space<vmem>>, vector<1x128xf32>
    %34 = vector.broadcast %33 : vector<1x128xf32> to vector<16x128xf32>
    %35 = arith.addf %32, %34 : vector<16x128xf32>
    %cst_14 = arith.constant 0.000000e+00 : f32
    %36 = vector.broadcast %cst_14 : f32 to vector<16x128xf32>
    %37 = arith.maximumf %35, %36 : vector<16x128xf32>
    %38 = tpu.iota {dimensions = array<i32: 1>} : vector<16x128xi32>
    %c33_i32 = arith.constant 33 : i32
    %39 = vector.broadcast %c33_i32 : i32 to vector<16x128xi32>
    %40 = arith.cmpi eq, %38, %39 : vector<16x128xi32>
    %cst_15 = arith.constant 1.000000e+00 : f32
    %41 = vector.broadcast %cst_15 : f32 to vector<16x128xf32>
    %42 = arith.select %40, %41, %37 : vector<16x128xi1>, vector<16x128xf32>
    %43 = arith.truncf %42 : vector<16x128xf32> to vector<16x128xbf16>
    %c0_16 = arith.constant 0 : index
    %c0_17 = arith.constant 0 : index
    %44 = vector.load %arg5[%c0_16, %c0_17] : memref<128x128xf32, #tpu.memory_space<vmem>>, vector<128x128xf32>
    %45 = arith.truncf %44 : vector<128x128xf32> to vector<128x128xbf16>
    %cst_18 = arith.constant dense<0.000000e+00> : vector<16x128xf32>
    %46 = tpu.matmul %43, %45, %cst_18 {dimension_numbers = #tpu.dot_dimension_numbers<[1], [0], [0], [1], [0, 0, 1, 1], [], []>} : vector<16x128xbf16>, vector<128x128xbf16>, vector<16x128xf32> -> vector<16x128xf32>
    %47 = vector.extract_strided_slice %46 {offsets = [0, 8], sizes = [16, 1], strides = [1, 1]} : vector<16x128xf32> to vector<16x1xf32>
    %c0_19 = arith.constant 0 : index
    %c0_20 = arith.constant 0 : index
    %48 = vector.load %arg6[%c0_19, %c0_20] : memref<1x128xf32, #tpu.memory_space<vmem>>, vector<1x128xf32>
    %49 = arith.truncf %48 : vector<1x128xf32> to vector<1x128xbf16>
    %50 = arith.truncf %46 : vector<16x128xf32> to vector<16x128xbf16>
    %cst_21 = arith.constant dense<0.000000e+00> : vector<1x16xf32>
    %51 = tpu.matmul %49, %50, %cst_21 {dimension_numbers = #tpu.dot_dimension_numbers<[1], [1], [0], [0], [0, 0, 1, 0], [], []>} : vector<1x128xbf16>, vector<16x128xbf16>, vector<1x16xf32> -> vector<1x16xf32>
    %52 = vector.broadcast %47 : vector<16x1xf32> to vector<16x16xf32>
    %53 = vector.broadcast %51 : vector<1x16xf32> to vector<16x16xf32>
    %54 = arith.addf %52, %53 : vector<16x16xf32>
    %cst_22 = arith.constant 0.000000e+00 : f32
    %55 = vector.broadcast %cst_22 : f32 to vector<16x16xf32>
    %56 = arith.cmpf oge, %54, %55 : vector<16x16xf32>
    %cst_23 = arith.constant 2.000000e-01 : f32
    %57 = vector.broadcast %cst_23 : f32 to vector<16x16xf32>
    %58 = arith.mulf %57, %54 : vector<16x16xf32>
    %59 = arith.select %56, %54, %58 : vector<16x16xi1>, vector<16x16xf32>
    %60 = math.exp %59 : vector<16x16xf32>
    %61 = arith.mulf %5, %60 : vector<16x16xf32>
    %62 = arith.truncf %61 : vector<16x16xf32> to vector<16x16xbf16>
    %63 = arith.truncf %46 : vector<16x128xf32> to vector<16x128xbf16>
    %cst_24 = arith.constant dense<0.000000e+00> : vector<16x128xf32>
    %64 = tpu.matmul %62, %63, %cst_24 {dimension_numbers = #tpu.dot_dimension_numbers<[0], [0], [1], [1], [0, 1, 1, 1], [], []>} : vector<16x16xbf16>, vector<16x128xbf16>, vector<16x128xf32> -> vector<16x128xf32>
    %65 = vector.extract_strided_slice %64 {offsets = [0, 9], sizes = [16, 1], strides = [1, 1]} : vector<16x128xf32> to vector<16x1xf32>
    %66 = tpu.reciprocal %65 {approx = true} : vector<16x1xf32> -> vector<16x1xf32>
    %67 = vector.broadcast %66 : vector<16x1xf32> to vector<16x128xf32>
    %68 = arith.mulf %64, %67 : vector<16x128xf32>
    %c0_25 = arith.constant 0 : index
    %c0_26 = arith.constant 0 : index
    %69 = vector.load %arg7[%c0_25, %c0_26] : memref<1x128xf32, #tpu.memory_space<vmem>>, vector<1x128xf32>
    %70 = vector.broadcast %69 : vector<1x128xf32> to vector<16x128xf32>
    %71 = arith.addf %68, %70 : vector<16x128xf32>
    %72 = tpu.iota {dimensions = array<i32: 1>} : vector<16x128xi32>
    %c9_i32 = arith.constant 9 : i32
    %73 = vector.broadcast %c9_i32 : i32 to vector<16x128xi32>
    %74 = arith.cmpi eq, %72, %73 : vector<16x128xi32>
    %cst_27 = arith.constant 1.000000e+00 : f32
    %75 = vector.broadcast %cst_27 : f32 to vector<16x128xf32>
    %76 = arith.select %74, %75, %71 : vector<16x128xi1>, vector<16x128xf32>
    %c0_28 = arith.constant 0 : index
    %c0_29 = arith.constant 0 : index
    %77 = vector.load %arg8[%c0_28, %c0_29] : memref<16x128xf32, #tpu.memory_space<vmem>>, vector<16x128xf32>
    tpu.vector_store %arg8[%c0_28, %c0_29], %76 {strides = array<i32>} : memref<16x128xf32, #tpu.memory_space<vmem>>, vector<16x128xf32>,
    return
  }
}

</mosaic_0001>

<llo_original>
// kernel: dense_gat_forward.1
$region0: #{dense_gat_forward.1}
  #allocation0 [shape = 'u32[]', space=smem, size = 0x4, offset = 0x4, fixed_abs, tag = 'smem constant byte address 0x4 - core index']
  #allocation1 [shape = 'u32[144,128]{1,0:T(1,128)}', space=vmem, size = 0x12000, scoped, tag = 'internal scratch']
  %s0 = inlined_call_operand.vmem [shape: f32[16,128], index: 0, kind: input, shape index: {}]
  %s1 = inlined_call_operand.vmem [shape: f32[16,16], index: 1, kind: input, shape index: {}]
  %s2 = inlined_call_operand.vmem [shape: f32[128,128], index: 2, kind: input, shape index: {}]
  %s3 = inlined_call_operand.vmem [shape: f32[1,128], index: 3, kind: input, shape index: {}]
  %s4 = inlined_call_operand.vmem [shape: f32[1,128], index: 4, kind: input, shape index: {}]
  %s5 = inlined_call_operand.vmem [shape: f32[128,128], index: 5, kind: input, shape index: {}]
  %s6 = inlined_call_operand.vmem [shape: f32[1,128], index: 6, kind: input, shape index: {}]
  %s7 = inlined_call_operand.vmem [shape: f32[1,128], index: 7, kind: input, shape index: {}]
  %s8 = inlined_call_operand.vmem [shape: f32[16,128], index: 8, kind: output, shape index: {}]
  %s9 = sld [smem:[#allocation0]]
  $region42: #{dense_gat_forward.1} parent=0
    _
  %s11 = ssub.s32 1, %s9
  %s12 = scalar_select 0, %s11, %s9
  // Predicated region
  $region2: #{dense_gat_forward.1} parent=0 // pred_check
    _
  $region3: #{dense_gat_forward.1} parent=0 // pred_check_branch
    %14 = sbr.rel (0) target = $region5
  $region4: #{dense_gat_forward.1} parent=0 // pred_region
    _
  $region5: #{dense_gat_forward.1} parent=0 // pred_fallthru
    _
  // Predicated region
  $region6: #{dense_gat_forward.1} parent=0 // pred_check
    _
  $region7: #{dense_gat_forward.1} parent=0 // pred_check_branch
    %16 = sbr.rel (0) target = $region9
  $region8: #{dense_gat_forward.1} parent=0 // pred_region
    _
  $region9: #{dense_gat_forward.1} parent=0 // pred_fallthru
    _
  // Predicated region
  $region10: #{dense_gat_forward.1} parent=0 // pred_check
    _
  $region11: #{dense_gat_forward.1} parent=0 // pred_check_branch
    %18 = sbr.rel (0) target = $region13
  $region12: #{dense_gat_forward.1} parent=0 // pred_region
    _
  $region13: #{dense_gat_forward.1} parent=0 // pred_fallthru
    _
  // Predicated region
  $region14: #{dense_gat_forward.1} parent=0 // pred_check
    _
  $region15: #{dense_gat_forward.1} parent=0 // pred_check_branch
    %20 = sbr.rel (0) target = $region17
  $region16: #{dense_gat_forward.1} parent=0 // pred_region
    _
  $region17: #{dense_gat_forward.1} parent=0 // pred_fallthru
    _
  // Predicated region
  $region18: #{dense_gat_forward.1} parent=0 // pred_check
    _
  $region19: #{dense_gat_forward.1} parent=0 // pred_check_branch
    %22 = sbr.rel (0) target = $region21
  $region20: #{dense_gat_forward.1} parent=0 // pred_region
    _
  $region21: #{dense_gat_forward.1} parent=0 // pred_fallthru
    _
  // Predicated region
  $region22: #{dense_gat_forward.1} parent=0 // pred_check
    _
  $region23: #{dense_gat_forward.1} parent=0 // pred_check_branch
    %24 = sbr.rel (0) target = $region25
  $region24: #{dense_gat_forward.1} parent=0 // pred_region
    _
  $region25: #{dense_gat_forward.1} parent=0 // pred_fallthru
    _
  // Predicated region
  $region26: #{dense_gat_forward.1} parent=0 // pred_check
    _
  $region27: #{dense_gat_forward.1} parent=0 // pred_check_branch
    %26 = sbr.rel (0) target = $region29
  $region28: #{dense_gat_forward.1} parent=0 // pred_region
    _
  $region29: #{dense_gat_forward.1} parent=0 // pred_fallthru
    _
  // Predicated region
  $region30: #{dense_gat_forward.1} parent=0 // pred_check
    _
  $region31: #{dense_gat_forward.1} parent=0 // pred_check_branch
    %28 = sbr.rel (0) target = $region33
  $region32: #{dense_gat_forward.1} parent=0 // pred_region
    _
  $region33: #{dense_gat_forward.1} parent=0 // pred_fallthru
    _
  %v30 = vlaneseq
  %v31 = vshrl.u32 %v30, 7
  %v32 = vadd.s32 %v31, 8
  %v33 = vlaneseq
  %v34 = vand.u32 %v33, 127
  %vm35 = vcmp.eq.s32.totalorder %v31, %v34
  %vm36 = vcmp.eq.s32.totalorder %v32, %v34
  %v37 = vld [vmem:[%s1] sm:$0xff]
  %v38 = vld [vmem:[%s1 + $0x8] sm:$0xff]
  %v39 = vsel %vm35, 1.0, %v37
  %v40 = vsel %vm36, 1.0, %v38
  %v41 = vld [vmem:[%s0] sm:$0xff]
  %v42 = vld [vmem:[%s0 + $0x8] sm:$0xff]
  %v43 = vpack.c.bf16 %v42, %v41
  %v44 = vld [vmem:[%s2] sm:$0xff]
  %v45 = vld [vmem:[%s2 + $0x8] sm:$0xff]
  %v46 = vld [vmem:[%s2 + $0x10] sm:$0xff]
  %v47 = vld [vmem:[%s2 + $0x18] sm:$0xff]
  %v48 = vld [vmem:[%s2 + $0x20] sm:$0xff]
  %v49 = vld [vmem:[%s2 + $0x28] sm:$0xff]
  %v50 = vld [vmem:[%s2 + $0x30] sm:$0xff]
  %v51 = vld [vmem:[%s2 + $0x38] sm:$0xff]
  %v52 = vld [vmem:[%s2 + $0x40] sm:$0xff]
  %v53 = vld [vmem:[%s2 + $0x48] sm:$0xff]
  %v54 = vld [vmem:[%s2 + $0x50] sm:$0xff]
  %v55 = vld [vmem:[%s2 + $0x58] sm:$0xff]
  %v56 = vld [vmem:[%s2 + $0x60] sm:$0xff]
  %v57 = vld [vmem:[%s2 + $0x68] sm:$0xff]
  %v58 = vld [vmem:[%s2 + $0x70] sm:$0xff]
  %v59 = vld [vmem:[%s2 + $0x78] sm:$0xff]
  %v60 = vpack.c.bf16 %v45, %v44
  %v61 = vpack.c.bf16 %v47, %v46
  %v62 = vpack.c.bf16 %v49, %v48
  %v63 = vpack.c.bf16 %v51, %v50
  %v64 = vpack.c.bf16 %v53, %v52
  %v65 = vpack.c.bf16 %v55, %v54
  %v66 = vpack.c.bf16 %v57, %v56
  %v67 = vpack.c.bf16 %v59, %v58
  %68 = vmatprep.subr.bf16.mxu0 0
  %69 = vmatpush1.bf16.msra.mxu0 %v67
  %70 = vmatprep.subr.bf16.mxu0 0
  %71 = vmatpush1.bf16.msra.mxu0 %v66
  %72 = vmatprep.subr.bf16.mxu0 0
  %73 = vmatpush1.bf16.msra.mxu0 %v65
  %74 = vmatprep.subr.bf16.mxu0 0
  %75 = vmatpush1.bf16.msra.mxu0 %v64
  %76 = vmatprep.subr.bf16.mxu0 0
  %77 = vmatpush1.bf16.msra.mxu0 %v63
  %78 = vmatprep.subr.bf16.mxu0 0
  %79 = vmatpush1.bf16.msra.mxu0 %v62
  %80 = vmatprep.subr.bf16.mxu0 0
  %81 = vmatpush1.bf16.msra.mxu0 %v61
  %82 = vmatprep.subr.bf16.mxu0 0
  %83 = vmatpush1.bf16.msra.mxu0 %v60
  %84 = vmatprep.subr.bf16.mxu0 0
  %85 = vmatpush2.bf16.msra.mxu0 0
  %86 = vmatprep.subr.bf16.mxu0 0
  %87 = vmatpush2.bf16.msra.mxu0 0
  %88 = vmatprep.subr.bf16.mxu0 0
  %89 = vmatpush2.bf16.msra.mxu0 0
  %90 = vmatprep.subr.bf16.mxu0 0
  %91 = vmatpush2.bf16.msra.mxu0 0
  %92 = vmatprep.subr.bf16.mxu0 0
  %93 = vmatpush2.bf16.msra.mxu0 0
  %94 = vmatprep.subr.bf16.mxu0 0
  %95 = vmatpush2.bf16.msra.mxu0 0
  %96 = vmatprep.subr.bf16.mxu0 0
  %97 = vmatpush2.bf16.msra.mxu0 0
  %98 = vmatprep.subr.bf16.mxu0 0
  %99 = vmatpush2.bf16.msra.mxu0 0
  %100 = vmatprep.mubr.bf16.mxu0 0
  %101 = vmatmul.mubr.bf16.gmra.mxu0 %v43
  %v102 = vpop.f32.mrf.mxu0
  %v103 = vadd.f32 0.0, %v102
  %v104 = vpop.f32.mrf.mxu0
  %v105 = vpop.f32.mrf.mxu0
  %v106 = vadd.f32 0.0, %v105
  %v107 = vpop.f32.mrf.mxu0
  %108 = vdwg.mxu0
  %v109 = vld [vmem:[%s3] sm:$0x1]
  %v110 = vpack.c.bf16 %v109, %v109
  %v111 = vpack.c.bf16 %v106, %v103
  %112 = vmatprep.subr.bf16.mxu0 0
  %113 = vmatpush1.bf16.xpose.msra.mxu0 0
  %114 = vmatprep.subr.bf16.mxu0 0
  %115 = vmatpush1.bf16.xpose.msra.mxu0 0
  %116 = vmatprep.subr.bf16.mxu0 0
  %117 = vmatpush1.bf16.xpose.msra.mxu0 0
  %118 = vmatprep.subr.bf16.mxu0 0
  %119 = vmatpush1.bf16.xpose.msra.mxu0 0
  %120 = vmatprep.subr.bf16.mxu0 0
  %121 = vmatpush1.bf16.xpose.msra.mxu0 0
  %122 = vmatprep.subr.bf16.mxu0 0
  %123 = vmatpush1.bf16.xpose.msra.mxu0 0
  %124 = vmatprep.subr.bf16.mxu0 0
  %125 = vmatpush1.bf16.xpose.msra.mxu0 0
  %126 = vmatprep.subr.bf16.mxu0 0
  %127 = vmatpush1.bf16.xpose.msra.mxu0 %v111
  %128 = vmatprep.subr.bf16.mxu0 0
  %129 = vmatpush2.bf16.xpose.msra.mxu0 0
  %130 = vmatprep.subr.bf16.mxu0 0
  %131 = vmatpush2.bf16.xpose.msra.mxu0 0
  %132 = vmatprep.subr.bf16.mxu0 0
  %133 = vmatpush2.bf16.xpose.msra.mxu0 0
  %134 = vmatprep.subr.bf16.mxu0 0
  %135 = vmatpush2.bf16.xpose.msra.mxu0 0
  %136 = vmatprep.subr.bf16.mxu0 0
  %137 = vmatpush2.bf16.xpose.msra.mxu0 0
  %138 = vmatprep.subr.bf16.mxu0 0
  %139 = vmatpush2.bf16.xpose.msra.mxu0 0
  %140 = vmatprep.subr.bf16.mxu0 0
  %141 = vmatpush2.bf16.xpose.msra.mxu0 0
  %142 = vmatprep.subr.bf16.mxu0 0
  %143 = vmatpush2.bf16.xpose.msra.mxu0 0
  %144 = vmatprep.mubr.bf16.mxu0 0
  %145 = vmatmul.mubr.bf16.gmra.mxu0 %v110
  %v146 = vpop.f32.mrf.mxu0
  %v147 = vadd.f32 0.0, %v146
  %v148 = vpop.f32.mrf.mxu0
  %v149 = vpop.f32.mrf.mxu0
  %v150 = vpop.f32.mrf.mxu0
  %151 = vdwg.mxu0
  %153 = vset.pattern.permute.xlu0 32
  %154 = vperm.xlu0 %153, %v103
  %v155 = vpop.permute.xlu0 %154
  %158 = vset.pattern.permute.xlu0 32
  %159 = vperm.xlu0 %158, %v106
  %v160 = vpop.permute.xlu0 %159
  %v162 = vlaneseq
  %v163 = vshrl.u32 %v162, 7
  %v164 = vsub.s32 0, %v163
  %v165 = vrot.slane %v147, %v164
  %v166 = vadd.f32 %v155, %v165
  %v167 = vadd.f32 %v160, %v165
  %vm168 = vcmp.ge.f32.partialorder %v166, 0.0
  %vm169 = vcmp.ge.f32.partialorder %v167, 0.0
  %v170 = vmul.f32 %v166, 0.2
  %v171 = vmul.f32 %v167, 0.2
  %v172 = vsel %vm168, %v166, %v170
  %v173 = vsel %vm169, %v167, %v171
  %v174 = vmul.f32 %v172, 1.442695
  %v175 = vpow.pop %v174
  %v176 = vmul.f32 %v173, 1.442695
  %v177 = vpow.pop %v176
  %v178 = vmul.f32 %v39, %v175
  %v179 = vmul.f32 %v40, %v177
  %v180 = vpack.c.bf16 %v179, %v178
  %181 = vxpose.xlu0.c.b16.start [1/8] %v180, 128
  %182 = vxpose.xlu0.c.b16.cont [2/8] 0, 128
  %183 = vxpose.xlu0.c.b16.cont [3/8] 0, 128
  %184 = vxpose.xlu0.c.b16.cont [4/8] 0, 128
  %185 = vxpose.xlu0.c.b16.cont [5/8] 0, 128
  %186 = vxpose.xlu0.c.b16.cont [6/8] 0, 128
  %187 = vxpose.xlu0.c.b16.cont [7/8] 0, 128
  %188 = vxpose.xlu0.c.b16.end [8/8] 0, 128
  %v189 = vpop.trf.xlu0
  %v190 = vpop.trf.xlu0
  %v191 = vpop.trf.xlu0
  %v192 = vpop.trf.xlu0
  %v193 = vpop.trf.xlu0
  %v194 = vpop.trf.xlu0
  %v195 = vpop.trf.xlu0
  %v196 = vpop.trf.xlu0
  %vm197 = vcmask 130048
  %v199 = vsel %vm197, %v189, 0
  %201 = vmatprep.subr.bf16.mxu0 0
  %202 = vmatpush1.bf16.msra.mxu0 0
  %203 = vmatprep.subr.bf16.mxu0 0
  %204 = vmatpush1.bf16.msra.mxu0 0
  %205 = vmatprep.subr.bf16.mxu0 0
  %206 = vmatpush1.bf16.msra.mxu0 0
  %207 = vmatprep.subr.bf16.mxu0 0
  %208 = vmatpush1.bf16.msra.mxu0 0
  %209 = vmatprep.subr.bf16.mxu0 0
  %210 = vmatpush1.bf16.msra.mxu0 0
  %211 = vmatprep.subr.bf16.mxu0 0
  %212 = vmatpush1.bf16.msra.mxu0 0
  %213 = vmatprep.subr.bf16.mxu0 0
  %214 = vmatpush1.bf16.msra.mxu0 0
  %215 = vmatprep.subr.bf16.mxu0 0
  %216 = vmatpush1.bf16.msra.mxu0 %v111
  %217 = vmatprep.subr.bf16.mxu0 0
  %218 = vmatpush2.bf16.msra.mxu0 0
  %219 = vmatprep.subr.bf16.mxu0 0
  %220 = vmatpush2.bf16.msra.mxu0 0
  %221 = vmatprep.subr.bf16.mxu0 0
  %222 = vmatpush2.bf16.msra.mxu0 0
  %223 = vmatprep.subr.bf16.mxu0 0
  %224 = vmatpush2.bf16.msra.mxu0 0
  %225 = vmatprep.subr.bf16.mxu0 0
  %226 = vmatpush2.bf16.msra.mxu0 0
  %227 = vmatprep.subr.bf16.mxu0 0
  %228 = vmatpush2.bf16.msra.mxu0 0
  %229 = vmatprep.subr.bf16.mxu0 0
  %230 = vmatpush2.bf16.msra.mxu0 0
  %231 = vmatprep.subr.bf16.mxu0 0
  %232 = vmatpush2.bf16.msra.mxu0 0
  %233 = vmatprep.mubr.bf16.mxu0 0
  %234 = vmatmul.mubr.bf16.gmra.mxu0 %v199
  %v235 = vpop.f32.mrf.mxu0
  %v236 = vadd.f32 0.0, %v235
  %v237 = vpop.f32.mrf.mxu0
  %v238 = vpop.f32.mrf.mxu0
  %v239 = vadd.f32 0.0, %v238
  %v240 = vpop.f32.mrf.mxu0
  %241 = vdwg.mxu0
  %v242 = vrcp.pop %v236
  %v243 = vrcp.pop %v239
  %245 = vset.pattern.permute.xlu0 33
  %246 = vperm.xlu0 %245, %v242
  %v247 = vpop.permute.xlu0 %246
  %250 = vset.pattern.permute.xlu0 33
  %251 = vperm.xlu0 %250, %v243
  %v252 = vpop.permute.xlu0 %251
  %v254 = vmul.f32 %v236, %v247
  %v255 = vmul.f32 %v239, %v252
  %v256 = vld [vmem:[%s4] sm:$0x1]
  %v258 = vlaneseq
  %v259 = vshrl.u32 %v258, 7
  %v260 = vsub.s32 0, %v259
  %v261 = vrot.slane %v256, %v260
  %v263 = vadd.f32 %v254, %v261
  %v264 = vadd.f32 %v255, %v261
  %v265 = vmax.f32 %v263, 0.0
  %v266 = vmax.f32 %v264, 0.0
  %vm267 = vcmp.eq.s32.totalorder %v34, 33
  %v268 = vsel %vm267, 1.0, %v265
  %v269 = vsel %vm267, 1.0, %v266
  %v270 = vpack.c.bf16 %v269, %v268
  %v271 = vld [vmem:[%s5] sm:$0xff]
  %v272 = vld [vmem:[%s5 + $0x8] sm:$0xff]
  %v273 = vld [vmem:[%s5 + $0x10] sm:$0xff]
  %v274 = vld [vmem:[%s5 + $0x18] sm:$0xff]
  %v275 = vld [vmem:[%s5 + $0x20] sm:$0xff]
  %v276 = vld [vmem:[%s5 + $0x28] sm:$0xff]
  %v277 = vld [vmem:[%s5 + $0x30] sm:$0xff]
  %v278 = vld [vmem:[%s5 + $0x38] sm:$0xff]
  %v279 = vld [vmem:[%s5 + $0x40] sm:$0xff]
  %v280 = vld [vmem:[%s5 + $0x48] sm:$0xff]
  %v281 = vld [vmem:[%s5 + $0x50] sm:$0xff]
  %v282 = vld [vmem:[%s5 + $0x58] sm:$0xff]
  %v283 = vld [vmem:[%s5 + $0x60] sm:$0xff]
  %v284 = vld [vmem:[%s5 + $0x68] sm:$0xff]
  %v285 = vld [vmem:[%s5 + $0x70] sm:$0xff]
  %v286 = vld [vmem:[%s5 + $0x78] sm:$0xff]
  %v287 = vpack.c.bf16 %v272, %v271
  %v288 = vpack.c.bf16 %v274, %v273
  %v289 = vpack.c.bf16 %v276, %v275
  %v290 = vpack.c.bf16 %v278, %v277
  %v291 = vpack.c.bf16 %v280, %v279
  %v292 = vpack.c.bf16 %v282, %v281
  %v293 = vpack.c.bf16 %v284, %v283
  %v294 = vpack.c.bf16 %v286, %v285
  %295 = vmatprep.subr.bf16.mxu0 0
  %296 = vmatpush1.bf16.msra.mxu0 %v294
  %297 = vmatprep.subr.bf16.mxu0 0
  %298 = vmatpush1.bf16.msra.mxu0 %v293
  %299 = vmatprep.subr.bf16.mxu0 0
  %300 = vmatpush1.bf16.msra.mxu0 %v292
  %301 = vmatprep.subr.bf16.mxu0 0
  %302 = vmatpush1.bf16.msra.mxu0 %v291
  %303 = vmatprep.subr.bf16.mxu0 0
  %304 = vmatpush1.bf16.msra.mxu0 %v290
  %305 = vmatprep.subr.bf16.mxu0 0
  %306 = vmatpush1.bf16.msra.mxu0 %v289
  %307 = vmatprep.subr.bf16.mxu0 0
  %308 = vmatpush1.bf16.msra.mxu0 %v288
  %309 = vmatprep.subr.bf16.mxu0 0
  %310 = vmatpush1.bf16.msra.mxu0 %v287
  %311 = vmatprep.subr.bf16.mxu0 0
  %312 = vmatpush2.bf16.msra.mxu0 0
  %313 = vmatprep.subr.bf16.mxu0 0
  %314 = vmatpush2.bf16.msra.mxu0 0
  %315 = vmatprep.subr.bf16.mxu0 0
  %316 = vmatpush2.bf16.msra.mxu0 0
  %317 = vmatprep.subr.bf16.mxu0 0
  %318 = vmatpush2.bf16.msra.mxu0 0
  %319 = vmatprep.subr.bf16.mxu0 0
  %320 = vmatpush2.bf16.msra.mxu0 0
  %321 = vmatprep.subr.bf16.mxu0 0
  %322 = vmatpush2.bf16.msra.mxu0 0
  %323 = vmatprep.subr.bf16.mxu0 0
  %324 = vmatpush2.bf16.msra.mxu0 0
  %325 = vmatprep.subr.bf16.mxu0 0
  %326 = vmatpush2.bf16.msra.mxu0 0
  %327 = vmatprep.mubr.bf16.mxu0 0
  %328 = vmatmul.mubr.bf16.gmra.mxu0 %v270
  %v329 = vpop.f32.mrf.mxu0
  %v330 = vadd.f32 0.0, %v329
  %v331 = vpop.f32.mrf.mxu0
  %v332 = vpop.f32.mrf.mxu0
  %v333 = vadd.f32 0.0, %v332
  %v334 = vpop.f32.mrf.mxu0
  %335 = vdwg.mxu0
  %v336 = vld [vmem:[%s6] sm:$0x1]
  %v337 = vpack.c.bf16 %v336, %v336
  %v338 = vpack.c.bf16 %v333, %v330
  %339 = vmatprep.subr.bf16.mxu0 0
  %340 = vmatpush1.bf16.xpose.msra.mxu0 0
  %341 = vmatprep.subr.bf16.mxu0 0
  %342 = vmatpush1.bf16.xpose.msra.mxu0 0
  %343 = vmatprep.subr.bf16.mxu0 0
  %344 = vmatpush1.bf16.xpose.msra.mxu0 0
  %345 = vmatprep.subr.bf16.mxu0 0
  %346 = vmatpush1.bf16.xpose.msra.mxu0 0
  %347 = vmatprep.subr.bf16.mxu0 0
  %348 = vmatpush1.bf16.xpose.msra.mxu0 0
  %349 = vmatprep.subr.bf16.mxu0 0
  %350 = vmatpush1.bf16.xpose.msra.mxu0 0
  %351 = vmatprep.subr.bf16.mxu0 0
  %352 = vmatpush1.bf16.xpose.msra.mxu0 0
  %353 = vmatprep.subr.bf16.mxu0 0
  %354 = vmatpush1.bf16.xpose.msra.mxu0 %v338
  %355 = vmatprep.subr.bf16.mxu0 0
  %356 = vmatpush2.bf16.xpose.msra.mxu0 0
  %357 = vmatprep.subr.bf16.mxu0 0
  %358 = vmatpush2.bf16.xpose.msra.mxu0 0
  %359 = vmatprep.subr.bf16.mxu0 0
  %360 = vmatpush2.bf16.xpose.msra.mxu0 0
  %361 = vmatprep.subr.bf16.mxu0 0
  %362 = vmatpush2.bf16.xpose.msra.mxu0 0
  %363 = vmatprep.subr.bf16.mxu0 0
  %364 = vmatpush2.bf16.xpose.msra.mxu0 0
  %365 = vmatprep.subr.bf16.mxu0 0
  %366 = vmatpush2.bf16.xpose.msra.mxu0 0
  %367 = vmatprep.subr.bf16.mxu0 0
  %368 = vmatpush2.bf16.xpose.msra.mxu0 0
  %369 = vmatprep.subr.bf16.mxu0 0
  %370 = vmatpush2.bf16.xpose.msra.mxu0 0
  %371 = vmatprep.mubr.bf16.mxu0 0
  %372 = vmatmul.mubr.bf16.gmra.mxu0 %v337
  %v373 = vpop.f32.mrf.mxu0
  %v374 = vadd.f32 0.0, %v373
  %v375 = vpop.f32.mrf.mxu0
  %v376 = vpop.f32.mrf.mxu0
  %v377 = vpop.f32.mrf.mxu0
  %378 = vdwg.mxu0
  %380 = vset.pattern.permute.xlu0 8
  %381 = vperm.xlu0 %380, %v330
  %v382 = vpop.permute.xlu0 %381
  %385 = vset.pattern.permute.xlu0 8
  %386 = vperm.xlu0 %385, %v333
  %v387 = vpop.permute.xlu0 %386
  %v389 = vlaneseq
  %v390 = vshrl.u32 %v389, 7
  %v391 = vsub.s32 0, %v390
  %v392 = vrot.slane %v374, %v391
  %v393 = vadd.f32 %v382, %v392
  %v394 = vadd.f32 %v387, %v392
  %vm395 = vcmp.ge.f32.partialorder %v393, 0.0
  %vm396 = vcmp.ge.f32.partialorder %v394, 0.0
  %v397 = vmul.f32 %v393, 0.2
  %v398 = vmul.f32 %v394, 0.2
  %v399 = vsel %vm395, %v393, %v397
  %v400 = vsel %vm396, %v394, %v398
  %v401 = vmul.f32 %v399, 1.442695
  %v402 = vpow.pop %v401
  %v403 = vmul.f32 %v400, 1.442695
  %v404 = vpow.pop %v403
  %v405 = vmul.f32 %v39, %v402
  %v406 = vmul.f32 %v40, %v404
  %v407 = vpack.c.bf16 %v406, %v405
  %408 = vxpose.xlu0.c.b16.start [1/8] %v407, 128
  %409 = vxpose.xlu0.c.b16.cont [2/8] 0, 128
  %410 = vxpose.xlu0.c.b16.cont [3/8] 0, 128
  %411 = vxpose.xlu0.c.b16.cont [4/8] 0, 128
  %412 = vxpose.xlu0.c.b16.cont [5/8] 0, 128
  %413 = vxpose.xlu0.c.b16.cont [6/8] 0, 128
  %414 = vxpose.xlu0.c.b16.cont [7/8] 0, 128
  %415 = vxpose.xlu0.c.b16.end [8/8] 0, 128
  %v416 = vpop.trf.xlu0
  %v417 = vpop.trf.xlu0
  %v418 = vpop.trf.xlu0
  %v419 = vpop.trf.xlu0
  %v420 = vpop.trf.xlu0
  %v421 = vpop.trf.xlu0
  %v422 = vpop.trf.xlu0
  %v423 = vpop.trf.xlu0
  %v425 = vsel %vm197, %v416, 0
  %427 = vmatprep.subr.bf16.mxu0 0
  %428 = vmatpush1.bf16.msra.mxu0 0
  %429 = vmatprep.subr.bf16.mxu0 0
  %430 = vmatpush1.bf16.msra.mxu0 0
  %431 = vmatprep.subr.bf16.mxu0 0
  %432 = vmatpush1.bf16.msra.mxu0 0
  %433 = vmatprep.subr.bf16.mxu0 0
  %434 = vmatpush1.bf16.msra.mxu0 0
  %435 = vmatprep.subr.bf16.mxu0 0
  %436 = vmatpush1.bf16.msra.mxu0 0
  %437 = vmatprep.subr.bf16.mxu0 0
  %438 = vmatpush1.bf16.msra.mxu0 0
  %439 = vmatprep.subr.bf16.mxu0 0
  %440 = vmatpush1.bf16.msra.mxu0 0
  %441 = vmatprep.subr.bf16.mxu0 0
  %442 = vmatpush1.bf16.msra.mxu0 %v338
  %443 = vmatprep.subr.bf16.mxu0 0
  %444 = vmatpush2.bf16.msra.mxu0 0
  %445 = vmatprep.subr.bf16.mxu0 0
  %446 = vmatpush2.bf16.msra.mxu0 0
  %447 = vmatprep.subr.bf16.mxu0 0
  %448 = vmatpush2.bf16.msra.mxu0 0
  %449 = vmatprep.subr.bf16.mxu0 0
  %450 = vmatpush2.bf16.msra.mxu0 0
  %451 = vmatprep.subr.bf16.mxu0 0
  %452 = vmatpush2.bf16.msra.mxu0 0
  %453 = vmatprep.subr.bf16.mxu0 0
  %454 = vmatpush2.bf16.msra.mxu0 0
  %455 = vmatprep.subr.bf16.mxu0 0
  %456 = vmatpush2.bf16.msra.mxu0 0
  %457 = vmatprep.subr.bf16.mxu0 0
  %458 = vmatpush2.bf16.msra.mxu0 0
  %459 = vmatprep.mubr.bf16.mxu0 0
  %460 = vmatmul.mubr.bf16.gmra.mxu0 %v425
  %v461 = vpop.f32.mrf.mxu0
  %v462 = vadd.f32 0.0, %v461
  %v463 = vpop.f32.mrf.mxu0
  %v464 = vpop.f32.mrf.mxu0
  %v465 = vadd.f32 0.0, %v464
  %v466 = vpop.f32.mrf.mxu0
  %467 = vdwg.mxu0
  %v468 = vrcp.pop %v462
  %v469 = vrcp.pop %v465
  %471 = vset.pattern.permute.xlu0 9
  %472 = vperm.xlu0 %471, %v468
  %v473 = vpop.permute.xlu0 %472
  %476 = vset.pattern.permute.xlu0 9
  %477 = vperm.xlu0 %476, %v469
  %v478 = vpop.permute.xlu0 %477
  %v480 = vmul.f32 %v462, %v473
  %v481 = vmul.f32 %v465, %v478
  %v482 = vld [vmem:[%s7] sm:$0x1]
  %v484 = vlaneseq
  %v485 = vshrl.u32 %v484, 7
  %v486 = vsub.s32 0, %v485
  %v487 = vrot.slane %v482, %v486
  %v489 = vadd.f32 %v480, %v487
  %v490 = vadd.f32 %v481, %v487
  %vm491 = vcmp.eq.s32.totalorder %v34, 9
  %v492 = vsel %vm491, 1.0, %v489
  %v493 = vsel %vm491, 1.0, %v490
  %494 = vst [vmem:[%s8] sm:$0xff] %v492
  %495 = vst [vmem:[%s8 + $0x8] sm:$0xff] %v493
  // Predicated region
  $region34: #{dense_gat_forward.1} parent=0 // pred_check
    _
  $region35: #{dense_gat_forward.1} parent=0 // pred_check_branch
    %497 = sbr.rel (0) target = $region37
  $region36: #{dense_gat_forward.1} parent=0 // pred_region
    _
  $region37: #{dense_gat_forward.1} parent=0 // pred_fallthru
    _
  // Predicated region
  $region38: #{dense_gat_forward.1} parent=0 // pred_check
    _
  $region39: #{dense_gat_forward.1} parent=0 // pred_check_branch
    %499 = sbr.rel (0) target = $region41
  $region40: #{dense_gat_forward.1} parent=0 // pred_region
    _
  $region41: #{dense_gat_forward.1} parent=0 // pred_fallthru
    _

</llo_original>
